<compile_context>
chip_gen: v7x
topology: tpu7x:2x2x1
jax: 0.10.0
libtpu: 0.0.40
codegen_flags: <defaults>
</compile_context>

<pallas_src>
import functools
import math

import jax
import jax.numpy as jnp
from jax import lax
from jax.experimental import pallas as pl
from jax.experimental.pallas import tpu as pltpu

GAMMA = 2.0          # fixed to 2 -> implemented as q*q (no pow, no NaN hazard)
ALPHA = 0.25
IGNORE = -100
EPSILON = 1e-16
LOG_EPS = math.log(EPSILON)
LANES = 128


def _focal_kernel(logits_ref, label_ref, out_ref, acc_loss_ref, acc_cnt_ref,
                  *, rows_total, tile_rows, need_row_mask):
    s = pl.program_id(1)          # pixel-range split ("parallel", feeds v7x's 2nd TensorCore)
    j = pl.program_id(2)          # reduction step within the split ("arbitrary")
    nj = pl.num_programs(2)

    @pl.when(j == 0)
    def _():
        acc_loss_ref[...] = jnp.zeros_like(acc_loss_ref)
        acc_cnt_ref[...] = jnp.zeros_like(acc_cnt_ref)

    x = logits_ref[0].astype(jnp.float32)     # (C, tile_rows, 128): classes leading, pixels dense
    lab = label_ref[0]                        # (tile_rows, 128) int32

    # Stable log-sum-exp over the class axis (leading dim -> plain vreg-to-vreg VPU reduces).
    m = jnp.max(x, axis=0)                                        # (tile_rows, 128)
    lse = m + jnp.log(jnp.sum(jnp.exp(x - m[None]), axis=0))      # (tile_rows, 128)

    # Logit at the target class (ignore_index matches no class -> contributes 0; masked below).
    class_ids = lax.broadcasted_iota(jnp.int32, x.shape, 0)
    x_t = jnp.sum(jnp.where(class_ids == lab[None], x, 0.0), axis=0)

    # Focal at the target class: -alpha * (1 - p)^2 * log(p); log(p) clamped near log(eps)
    # (no exp/log round-trip).
    log_p = jnp.maximum(x_t - lse, LOG_EPS)
    p_t = jnp.exp(log_p)
    q = 1.0 - p_t
    focal = (-ALPHA) * (q * q) * log_p

    valid = lab != IGNORE
    if need_row_mask:
        # Only emitted when the grid has ragged/duplicate steps. Positions use the un-clamped
        # step index so clamped duplicate tail blocks contribute exactly zero.
        row_ids = (s * nj + j) * tile_rows + lax.broadcasted_iota(jnp.int32, lab.shape, 0)
        valid = valid & (row_ids < rows_total)

    # Select-based masking (true select: NaN/Inf in padded/garbage lanes cannot leak).
    acc_loss_ref[...] += jnp.where(valid, focal, 0.0)
    acc_cnt_ref[...] += valid.astype(jnp.float32)

    @pl.when(j == nj - 1)
    def _():
        loss_lane = jnp.sum(acc_loss_ref[...], axis=0, keepdims=True)   # (1, 128)
        cnt_lane = jnp.sum(acc_cnt_ref[...], axis=0, keepdims=True)     # (1, 128)
        out_ref[...] = jnp.concatenate([loss_lane, cnt_lane], axis=0).reshape(1, 1, 2, LANES)


def focal_loss(logits, label, *, max_tile_rows=None):
    """logits: (N, C, H, W) float; label: (N, H, W) int. Returns scalar mean focal loss."""
    N, C, H, W = logits.shape
    HW = H * W

    x = logits.reshape(N, C, HW)
    lab = label.astype(jnp.int32).reshape(N, HW)

    # Pixels go on the 128-lane axis, pixel-rows on the sublane axis (sublane-dense epilogue).
    rem = HW % LANES
    if rem:
        # One pad pass only in the ragged case; padded labels are ignore_index -> self-masking,
        # padded logits are finite zeros (safe through exp/log before the select).
        pad = LANES - rem
        x = jnp.pad(x, ((0, 0), (0, 0), (0, pad)))
        lab = jnp.pad(lab, ((0, 0), (0, pad)), constant_values=IGNORE)
    rows_total = x.shape[-1] // LANES
    x = x.reshape(N, C, rows_total, LANES)         # free reshape
    lab = lab.reshape(N, rows_total, LANES)        # free reshape

    # Tile size: ~4 MiB of logits per grid step; keep the double-buffered working set
    # (2x logits + 2x labels + 2 dense f32 accumulators) under ~40 MiB so it also fits
    # v7x's 64 MiB physical VMEM. v5e/v6e have more headroom but the same tiles hit roofline.
    itemsize = jnp.dtype(x.dtype).itemsize
    bytes_per_row_logits = C * LANES * itemsize
    max_rows = max(8, (4 * 1024 * 1024 // bytes_per_row_logits) // 8 * 8)
    per_row_vmem = 2 * bytes_per_row_logits + 2 * LANES * 4 + 2 * LANES * 4
    max_rows = min(max_rows, max(8, (40 * 1024 * 1024 // per_row_vmem) // 8 * 8))
    if max_tile_rows is not None:
        max_rows = min(max_rows, max(8, max_tile_rows // 8 * 8))

    tile_rows = rows_total if rows_total <= max_rows else max_rows
    grid_p = pl.cdiv(rows_total, tile_rows)

    # Second "parallel" axis over the pixel range so both v7x TensorCores get work when N == 1.
    splits = 2 if (N == 1 and grid_p >= 2) else 1
    steps = pl.cdiv(grid_p, splits)
    need_row_mask = (splits * steps * tile_rows) != rows_total

    def _row_block(s, j):
        # Duplicate tail steps (splits * steps > grid_p) re-read the last block; they are
        # fully masked inside the kernel via the row-position check.
        return jnp.minimum(s * steps + j, grid_p - 1)

    kernel = functools.partial(_focal_kernel, rows_total=rows_total,
                               tile_rows=tile_rows, need_row_mask=need_row_mask)

    out = pl.pallas_call(
        kernel,
        out_shape=jax.ShapeDtypeStruct((N, splits, 2, LANES), jnp.float32),
        grid_spec=pltpu.PrefetchScalarGridSpec(
            num_scalar_prefetch=0,
            grid=(N, splits, steps),
            in_specs=[
                pl.BlockSpec((1, C, tile_rows, LANES),
                             lambda n, s, j: (n, 0, _row_block(s, j), 0)),
                pl.BlockSpec((1, tile_rows, LANES),
                             lambda n, s, j: (n, _row_block(s, j), 0)),
            ],
            out_specs=pl.BlockSpec((1, 1, 2, LANES), lambda n, s, j: (n, s, 0, 0)),
            scratch_shapes=[
                pltpu.VMEM((tile_rows, LANES), jnp.float32),  # per-pixel loss partials
                pltpu.VMEM((tile_rows, LANES), jnp.float32),  # per-pixel valid-count partials
            ],
        ),
        compiler_params=pltpu.CompilerParams(
            dimension_semantics=("parallel", "parallel", "arbitrary"),
            vmem_limit_bytes=48 * 1024 * 1024,
        ),
    )(x, lab)

    # reduction == 'mean': loss.sum() / n_valid.sum()
    # Note: like the PyTorch reference, this yields NaN/Inf if every pixel is ignore_index.
    loss_sum = jnp.sum(out[:, :, 0, :])
    n_valid = jnp.sum(out[:, :, 1, :])
    return loss_sum / n_valid


def _focal_loss_ref(logits, label):
    """Pure-JAX reference mirroring the PyTorch module (reduction='mean')."""
    N, C, H, W = logits.shape
    label = label.astype(jnp.int32)
    ignore = label == IGNORE
    lab0 = jnp.where(ignore, 0, label)
    onehot = jax.nn.one_hot(lab0, C, axis=1, dtype=jnp.float32)
    onehot = jnp.where(ignore[:, None, :, :], 0.0, onehot)
    probs = jax.nn.softmax(logits.astype(jnp.float32), axis=1) + EPSILON
    focal = -ALPHA * jnp.square(1.0 - probs) * jnp.log(probs)
    loss = jnp.sum(onehot * focal, axis=1)
    loss = jnp.where(ignore, 0.0, loss)
    n_valid = jnp.sum(~ignore)
    return jnp.sum(loss) / n_valid


if __name__ == "__main__":
    key = jax.random.PRNGKey(0)

    def make_case(k, N, C, H, W, ignore_frac=0.1):
        k1, k2, k3 = jax.random.split(k, 3)
        logits = jax.random.normal(k1, (N, C, H, W), dtype=jnp.float32)
        label = jax.random.randint(k2, (N, H, W), 0, C, dtype=jnp.int32)
        ignore_mask = jax.random.uniform(k3, (N, H, W)) < ignore_frac
        label = jnp.where(ignore_mask, IGNORE, label)
        return logits, label

    k0, k1, k2 = jax.random.split(key, 3)

    # Main case (shapes implied by the module): N=2, C=4, H=W=16.
    logits, label = make_case(k0, 2, 4, 16, 16)
    out = focal_loss(logits, label)
    jax.block_until_ready(out)
    ref = _focal_loss_ref(logits, label)
    assert jnp.allclose(out, ref, rtol=1e-4, atol=1e-6), (out, ref)

    # Ragged spatial size (HW % 128 != 0) -> wrapper pad path with self-masking labels.
    logits2, label2 = make_case(k1, 1, 3, 20, 20)
    out2 = focal_loss(logits2, label2)
    ref2 = _focal_loss_ref(logits2, label2)
    assert jnp.allclose(out2, ref2, rtol=1e-4, atol=1e-6), (out2, ref2)

    # Multi-tile reduction + 2-way pixel split + remainder masking / clamped duplicate blocks.
    logits3, label3 = make_case(k2, 1, 4, 64, 80)
    out3 = focal_loss(logits3, label3, max_tile_rows=16)
    ref3 = _focal_loss_ref(logits3, label3)
    assert jnp.allclose(out3, ref3, rtol=1e-4, atol=1e-6), (out3, ref3)

    jax.block_until_ready((out2, out3))
    print("KERNEL_OK")
</pallas_src>

<mosaic_0001>
module attributes {stable_mosaic.version = 11 : i64} {
  func.func @_focal_kernel(%arg0: i32, %arg1: i32, %arg2: i32, %arg3: memref<1x4x2x128xf32, #tpu.memory_space<vmem>>, %arg4: memref<1x2x128xi32, #tpu.memory_space<vmem>>, %arg5: memref<1x1x2x128xf32, #tpu.memory_space<vmem>>, %arg6: memref<2x128xf32, #tpu.memory_space<vmem>>, %arg7: memref<2x128xf32, #tpu.memory_space<vmem>>) attributes {dimension_semantics = [#tpu.dimension_semantics<parallel>, #tpu.dimension_semantics<parallel>, #tpu.dimension_semantics<arbitrary>], iteration_bounds = array<i64: 2, 1, 1>, scalar_prefetch = 0 : i64, scratch_operands = 2 : i64, tpu.core_type = #tpu.core_type<tc>, window_params = [{transform_indices = @transform_0, window_bounds = array<i64: 1, 4, 2, 128>}, {transform_indices = @transform_1, window_bounds = array<i64: 1, 2, 128>}, {transform_indices = @transform_2, window_bounds = array<i64: 1, 1, 2, 128>}]} {
    %c0_i32 = arith.constant 0 : i32
    %0 = arith.cmpi eq, %arg2, %c0_i32 : i32
    %1 = arith.extui %0 : i1 to i32
    %c0_i32_0 = arith.constant 0 : i32
    %2 = arith.cmpi ne, %1, %c0_i32_0 : i32
    scf.if %2 {
      %cst_24 = arith.constant 0.000000e+00 : f32
      %47 = vector.broadcast %cst_24 : f32 to vector<2x128xf32>
      %c0_25 = arith.constant 0 : index
      %c0_26 = arith.constant 0 : index
      %48 = vector.load %arg6[%c0_25, %c0_26] : memref<2x128xf32, #tpu.memory_space<vmem>>, vector<2x128xf32>
      tpu.vector_store %arg6[%c0_25, %c0_26], %47 {strides = array<i32>} : memref<2x128xf32, #tpu.memory_space<vmem>>, vector<2x128xf32>,
      %cst_27 = arith.constant 0.000000e+00 : f32
      %49 = vector.broadcast %cst_27 : f32 to vector<2x128xf32>
      %c0_28 = arith.constant 0 : index
      %c0_29 = arith.constant 0 : index
      %50 = vector.load %arg7[%c0_28, %c0_29] : memref<2x128xf32, #tpu.memory_space<vmem>>, vector<2x128xf32>
      tpu.vector_store %arg7[%c0_28, %c0_29], %49 {strides = array<i32>} : memref<2x128xf32, #tpu.memory_space<vmem>>, vector<2x128xf32>,
    } else {
    }
    %c0 = arith.constant 0 : index
    %c0_1 = arith.constant 0 : index
    %c0_2 = arith.constant 0 : index
    %c0_3 = arith.constant 0 : index
    %3 = vector.load %arg3[%c0, %c0_1, %c0_2, %c0_3] : memref<1x4x2x128xf32, #tpu.memory_space<vmem>>, vector<1x4x2x128xf32>
    %4 = vector.shape_cast %3 : vector<1x4x2x128xf32> to vector<4x2x128xf32>
    %c0_4 = arith.constant 0 : index
    %c0_5 = arith.constant 0 : index
    %c0_6 = arith.constant 0 : index
    %5 = vector.load %arg4[%c0_4, %c0_5, %c0_6] : memref<1x2x128xi32, #tpu.memory_space<vmem>>, vector<1x2x128xi32>
    %6 = vector.shape_cast %5 : vector<1x2x128xi32> to vector<2x128xi32>
    %cst = arith.constant dense<0xFF800000> : vector<2x128xf32>
    %7 = vector.multi_reduction <maximumf>, %4, %cst [0] : vector<4x2x128xf32> to vector<2x128xf32>
    %8 = vector.shape_cast %7 : vector<2x128xf32> to vector<1x2x128xf32>
    %9 = vector.broadcast %8 : vector<1x2x128xf32> to vector<4x2x128xf32>
    %10 = arith.subf %4, %9 : vector<4x2x128xf32>
    %11 = math.exp %10 : vector<4x2x128xf32>
    %cst_7 = arith.constant dense<0.000000e+00> : vector<2x128xf32>
    %12 = vector.multi_reduction <add>, %11, %cst_7 [0] : vector<4x2x128xf32> to vector<2x128xf32>
    %13 = math.log %12 : vector<2x128xf32>
    %14 = arith.addf %7, %13 : vector<2x128xf32>
    %15 = tpu.iota {dimensions = array<i32: 0>} : vector<4x2x128xi32>
    %16 = vector.shape_cast %6 : vector<2x128xi32> to vector<1x2x128xi32>
    %17 = vector.broadcast %16 : vector<1x2x128xi32> to vector<4x2x128xi32>
    %18 = arith.cmpi eq, %15, %17 : vector<4x2x128xi32>
    %cst_8 = arith.constant 0.000000e+00 : f32
    %19 = vector.broadcast %cst_8 : f32 to vector<4x2x128xf32>
    %20 = arith.select %18, %4, %19 : vector<4x2x128xi1>, vector<4x2x128xf32>
    %cst_9 = arith.constant dense<0.000000e+00> : vector<2x128xf32>
    %21 = vector.multi_reduction <add>, %20, %cst_9 [0] : vector<4x2x128xf32> to vector<2x128xf32>
    %22 = arith.subf %21, %14 : vector<2x128xf32>
    %cst_10 = arith.constant -36.841362 : f32
    %23 = vector.broadcast %cst_10 : f32 to vector<2x128xf32>
    %24 = arith.maximumf %22, %23 : vector<2x128xf32>
    %25 = math.exp %24 : vector<2x128xf32>
    %cst_11 = arith.constant 1.000000e+00 : f32
    %26 = vector.broadcast %cst_11 : f32 to vector<2x128xf32>
    %27 = arith.subf %26, %25 : vector<2x128xf32>
    %28 = arith.mulf %27, %27 : vector<2x128xf32>
    %cst_12 = arith.constant -2.500000e-01 : f32
    %29 = vector.broadcast %cst_12 : f32 to vector<2x128xf32>
    %30 = arith.mulf %29, %28 : vector<2x128xf32>
    %31 = arith.mulf %30, %24 : vector<2x128xf32>
    %c-100_i32 = arith.constant -100 : i32
    %32 = vector.broadcast %c-100_i32 : i32 to vector<2x128xi32>
    %33 = arith.cmpi ne, %6, %32 : vector<2x128xi32>
    %c0_13 = arith.constant 0 : index
    %c0_14 = arith.constant 0 : index
    %34 = vector.load %arg6[%c0_13, %c0_14] : memref<2x128xf32, #tpu.memory_space<vmem>>, vector<2x128xf32>
    %cst_15 = arith.constant 0.000000e+00 : f32
    %35 = vector.broadcast %cst_15 : f32 to vector<2x128xf32>
    %36 = arith.select %33, %31, %35 : vector<2x128xi1>, vector<2x128xf32>
    %37 = arith.addf %34, %36 : vector<2x128xf32>
    %c0_16 = arith.constant 0 : index
    %c0_17 = arith.constant 0 : index
    %38 = vector.load %arg6[%c0_16, %c0_17] : memref<2x128xf32, #tpu.memory_space<vmem>>, vector<2x128xf32>
    tpu.vector_store %arg6[%c0_16, %c0_17], %37 {strides = array<i32>} : memref<2x128xf32, #tpu.memory_space<vmem>>, vector<2x128xf32>,
    %c0_18 = arith.constant 0 : index
    %c0_19 = arith.constant 0 : index
    %39 = vector.load %arg7[%c0_18, %c0_19] : memref<2x128xf32, #tpu.memory_space<vmem>>, vector<2x128xf32>
    %40 = arith.extui %33 : vector<2x128xi1> to vector<2x128xi32>
    %41 = arith.sitofp %40 : vector<2x128xi32> to vector<2x128xf32>
    %42 = arith.addf %39, %41 : vector<2x128xf32>
    %c0_20 = arith.constant 0 : index
    %c0_21 = arith.constant 0 : index
    %43 = vector.load %arg7[%c0_20, %c0_21] : memref<2x128xf32, #tpu.memory_space<vmem>>, vector<2x128xf32>
    tpu.vector_store %arg7[%c0_20, %c0_21], %42 {strides = array<i32>} : memref<2x128xf32, #tpu.memory_space<vmem>>, vector<2x128xf32>,
    %c0_i32_22 = arith.constant 0 : i32
    %44 = arith.cmpi eq, %arg2, %c0_i32_22 : i32
    %45 = arith.extui %44 : i1 to i32
    %c0_i32_23 = arith.constant 0 : i32
    %46 = arith.cmpi ne, %45, %c0_i32_23 : i32
    scf.if %46 {
      %c0_24 = arith.constant 0 : index
      %c0_25 = arith.constant 0 : index
      %47 = vector.load %arg6[%c0_24, %c0_25] : memref<2x128xf32, #tpu.memory_space<vmem>>, vector<2x128xf32>
      %cst_26 = arith.constant dense<0.000000e+00> : vector<128xf32>
      %48 = vector.multi_reduction <add>, %47, %cst_26 [0] : vector<2x128xf32> to vector<128xf32>
      %49 = vector.shape_cast %48 : vector<128xf32> to vector<1x128xf32>
      %c0_27 = arith.constant 0 : index
      %c0_28 = arith.constant 0 : index
      %50 = vector.load %arg7[%c0_27, %c0_28] : memref<2x128xf32, #tpu.memory_space<vmem>>, vector<2x128xf32>
      %cst_29 = arith.constant dense<0.000000e+00> : vector<128xf32>
      %51 = vector.multi_reduction <add>, %50, %cst_29 [0] : vector<2x128xf32> to vector<128xf32>
      %52 = vector.shape_cast %51 : vector<128xf32> to vector<1x128xf32>
      %53 = tpu.concatenate %49, %52 in 0 : vector<1x128xf32>, vector<1x128xf32> -> vector<2x128xf32>
      %54 = vector.shape_cast %53 : vector<2x128xf32> to vector<1x1x2x128xf32>
      %c0_30 = arith.constant 0 : index
      %c0_31 = arith.constant 0 : index
      %c0_32 = arith.constant 0 : index
      %c0_33 = arith.constant 0 : index
      %55 = vector.load %arg5[%c0_30, %c0_31, %c0_32, %c0_33] : memref<1x1x2x128xf32, #tpu.memory_space<vmem>>, vector<1x1x2x128xf32>
      tpu.vector_store %arg5[%c0_30, %c0_31, %c0_32, %c0_33], %54 {strides = array<i32>} : memref<1x1x2x128xf32, #tpu.memory_space<vmem>>, vector<1x1x2x128xf32>,
    } else {
    }
    return
  }
  func.func @transform_0(%arg0: i32, %arg1: i32, %arg2: i32) -> (i32, i32, i32, i32) {
    %c1_i32 = arith.constant 1 : i32
    %0 = arith.muli %arg1, %c1_i32 : i32
    %1 = arith.addi %0, %arg2 : i32
    %c0_i32 = arith.constant 0 : i32
    %2 = arith.minsi %1, %c0_i32 : i32
    %c0_i32_0 = arith.constant 0 : i32
    %c0_i32_1 = arith.constant 0 : i32
    %c0_i32_2 = arith.constant 0 : i32
    return %arg0, %c0_i32_0, %2, %c0_i32_1 : i32, i32, i32, i32
  }
  func.func @transform_1(%arg0: i32, %arg1: i32, %arg2: i32) -> (i32, i32, i32) {
    %c1_i32 = arith.constant 1 : i32
    %0 = arith.muli %arg1, %c1_i32 : i32
    %1 = arith.addi %0, %arg2 : i32
    %c0_i32 = arith.constant 0 : i32
    %2 = arith.minsi %1, %c0_i32 : i32
    %c0_i32_0 = arith.constant 0 : i32
    %c0_i32_1 = arith.constant 0 : i32
    return %arg0, %2, %c0_i32_0 : i32, i32, i32
  }
  func.func @transform_2(%arg0: i32, %arg1: i32, %arg2: i32) -> (i32, i32, i32, i32) {
    %c0_i32 = arith.constant 0 : i32
    %c0_i32_0 = arith.constant 0 : i32
    %c0_i32_1 = arith.constant 0 : i32
    return %arg0, %arg1, %c0_i32, %c0_i32_0 : i32, i32, i32, i32
  }
}

</mosaic_0001>

<llo_original>
// kernel: tpu_custom_call.1
$region0: #{tpu_custom_call.1}
  #allocation0 [shape = 'u32[]', space=smem, size = 0x4, offset = 0x4, fixed_abs, tag = 'smem constant byte address 0x4 - core index']
  #allocation1 [shape = 'u32[144,128]{1,0:T(1,128)}', space=vmem, size = 0x12000, scoped, tag = 'internal scratch']
  #allocation2 [shape = 'f32[2,128]{1,0:T(2,128)}', space=vmem, size = 0x400, scoped, tag = 'scratch operand']
  #allocation3 [shape = 'f32[2,128]{1,0:T(2,128)}', space=vmem, size = 0x400, scoped, tag = 'scratch operand']
  %s0 = inlined_call_operand.hbm [shape: f32[2,4,2,128], index: 0, kind: input, shape index: {}]
  %s1 = inlined_call_operand.hbm [shape: s32[2,2,128], index: 1, kind: input, shape index: {}]
  %s2 = inlined_call_operand.hbm [shape: f32[2,1,2,128], index: 2, kind: output, shape index: {}]
  %s3 = sld [smem:[#allocation0]]
  $region57: #{tpu_custom_call.1} parent=0
    _
  %s5 = ssub.s32 1, %s3
  %s6 = scalar_select 0, %s5, %s3
  $region1: #{tpu_custom_call.1} parent=0
    #allocation4 [shape = 'u8[8192]{0}', space=vmem, size = 0x2000, scoped, tag = 'input window, operand 0']
    #allocation5 [shape = 's32[2]{0}', space=sflag, size = 0x8, scoped, tag = 'scoped memory for tpu_custom_call.1']
    #allocation6 [shape = 's32[2]{0}', space=sflag, size = 0x8, scoped, tag = 'scoped memory for tpu_custom_call.1']
    #allocation7 [shape = 'u8[2048]{0}', space=vmem, size = 0x800, scoped, tag = 'input window, operand 1']
    #allocation8 [shape = 's32[2]{0}', space=sflag, size = 0x8, scoped, tag = 'scoped memory for tpu_custom_call.1']
    #allocation9 [shape = 'u8[2048]{0}', space=vmem, size = 0x800, scoped, tag = 'output window, operand 0']
    %7 = vsyncpa [#allocation5], 0
    %s8 = scalar_lea.sflag [#allocation5], 1
    %9 = vsyncpa %s8, 0
    %10 = vsyncpa [#allocation8], 0
    %s11 = scalar_lea.sflag [#allocation8], 1
    %12 = vsyncpa %s11, 0
    %13 = vsyncpa [#allocation6], 0
    %s14 = scalar_lea.sflag [#allocation6], 1
    %15 = vsyncpa %s14, 0
    loop: start=0, step=1, limit=4
    $region2: #{tpu_custom_call.1} parent=1 // loop_pre_header
      _
    $region3: #{tpu_custom_call.1} parent=1 // loop_header
      %s17 = sphi 0, %s21
      %p18 = scmp.ge.s32.totalorder %s17, 4
      %s24 = sphi 0, %s43
      %s25 = sphi 0, %s39
      %s26 = sphi 0, %s35
      %s27 = sphi 0, %s24
      %s28 = sphi 0, %s25
      %s29 = sphi 0, %s26
      %s30 = sphi 0, %s27
      %s31 = sphi 0, %s28
      %s32 = sphi 0, %s29
      %s54 = sphi 0, %s56
      %s57 = sphi 0, %s54
      %s58 = sphi 0, %s57
      %s74 = sphi 0, %s58
      %s88 = sphi 0, %s90
      %s91 = sphi 0, %s88
      %s92 = sphi 0, %s91
      %s108 = sphi 0, %s92
      %s116 = sphi 0, %s118
      %s119 = sphi 0, %s116
      %s120 = sphi 0, %s119
      %s136 = sphi 0, %s120
    $region4: #{tpu_custom_call.1} parent=1 // loop_header_branch
      %20 = sbr.rel (%p18) target = $region8
    $region5: #{tpu_custom_call.1} parent=1 // loop_body
      %s22 = ssub.s32 %s17, 1
      %s23 = ssub.s32 %s17, 2
      %s33 = sadd.s32 1, %s26
      %p34 = scmp.ge.s32.totalorder %s33, 1
      %s35 = scalar_select %p34, 0, %s33
      %s36 = sadd.s32 1, %s25
      %s37 = scalar_select %p34, %s36, %s25
      %p38 = scmp.ge.s32.totalorder %s37, 1
      %s39 = scalar_select %p38, 0, %s37
      %s40 = sadd.s32 1, %s24
      %s41 = scalar_select %p38, %s40, %s24
      %p42 = scmp.ge.s32.totalorder %s41, 2
      %s43 = scalar_select %p42, 0, %s41
      %s44 = sadd.s32 %s25, %s26
      %p45 = scmp.lt.s32.totalorder %s44, 0
      %s46 = scalar_select %p45, %s44, 0
      %s47 = sadd.s32 %s39, %s35
      %p48 = scmp.lt.s32.totalorder %s47, 0
      %s49 = scalar_select %p48, %s47, 0
      %s50 = ssub.s32 %s24, %s43
      %s51 = ssub.s32 %s46, %s49
      %s52 = sor.u32 %s50, %s51
      %p53 = scmp.eq.s32.totalorder %s52, 0
      %s55 = sadd.s32 %s54, 1
      %s56 = scalar_select %p53, %s54, %s55
      %p59 = pneg %p53
      %p60 = scmp.eq.s32.totalorder %s17, 1
      %p61 = por %p59, %p60
      %p62 = scmp.ne.s32.totalorder %s54, %s57
      %p63 = scmp.eq.s32.totalorder %s17, 0
      %p64 = por %p62, %p63
      %p65 = scmp.ne.s32.totalorder %s54, %s57
      %p66 = scmp.eq.s32.totalorder %s22, 1
      %p67 = por %p65, %p66
      %p68 = scmp.ne.s32.totalorder %s57, %s58
      %p69 = scmp.eq.s32.totalorder %s22, 0
      %p70 = por %p68, %p69
      %p71 = scmp.ne.s32.totalorder %s57, %s58
      %p72 = scmp.eq.s32.totalorder %s23, 1
      %p73 = por %p71, %p72
      %p75 = scmp.ne.s32.totalorder %s58, %s74
      %p76 = scmp.eq.s32.totalorder %s23, 0
      %p77 = por %p75, %p76
      %s78 = sadd.s32 %s25, %s26
      %p79 = scmp.lt.s32.totalorder %s78, 0
      %s80 = scalar_select %p79, %s78, 0
      %s81 = sadd.s32 %s39, %s35
      %p82 = scmp.lt.s32.totalorder %s81, 0
      %s83 = scalar_select %p82, %s81, 0
      %s84 = ssub.s32 %s24, %s43
      %s85 = ssub.s32 %s80, %s83
      %s86 = sor.u32 %s84, %s85
      %p87 = scmp.eq.s32.totalorder %s86, 0
      %s89 = sadd.s32 %s88, 1
      %s90 = scalar_select %p87, %s88, %s89
      %p93 = pneg %p87
      %p94 = scmp.eq.s32.totalorder %s17, 1
      %p95 = por %p93, %p94
      %p96 = scmp.ne.s32.totalorder %s88, %s91
      %p97 = scmp.eq.s32.totalorder %s17, 0
      %p98 = por %p96, %p97
      %p99 = scmp.ne.s32.totalorder %s88, %s91
      %p100 = scmp.eq.s32.totalorder %s22, 1
      %p101 = por %p99, %p100
      %p102 = scmp.ne.s32.totalorder %s91, %s92
      %p103 = scmp.eq.s32.totalorder %s22, 0
      %p104 = por %p102, %p103
      %p105 = scmp.ne.s32.totalorder %s91, %s92
      %p106 = scmp.eq.s32.totalorder %s23, 1
      %p107 = por %p105, %p106
      %p109 = scmp.ne.s32.totalorder %s92, %s108
      %p110 = scmp.eq.s32.totalorder %s23, 0
      %p111 = por %p109, %p110
      %s112 = ssub.s32 %s24, %s43
      %s113 = ssub.s32 %s25, %s39
      %s114 = sor.u32 %s112, %s113
      %p115 = scmp.eq.s32.totalorder %s114, 0
      %s117 = sadd.s32 %s116, 1
      %s118 = scalar_select %p115, %s116, %s117
      %p121 = pneg %p115
      %p122 = scmp.eq.s32.totalorder %s17, 1
      %p123 = por %p121, %p122
      %p124 = scmp.ne.s32.totalorder %s116, %s119
      %p125 = scmp.eq.s32.totalorder %s17, 0
      %p126 = por %p124, %p125
      %p127 = scmp.ne.s32.totalorder %s116, %s119
      %p128 = scmp.eq.s32.totalorder %s22, 1
      %p129 = por %p127, %p128
      %p130 = scmp.ne.s32.totalorder %s119, %s120
      %p131 = scmp.eq.s32.totalorder %s22, 0
      %p132 = por %p130, %p131
      %p133 = scmp.ne.s32.totalorder %s119, %s120
      %p134 = scmp.eq.s32.totalorder %s23, 1
      %p135 = por %p133, %p134
      %p137 = scmp.ne.s32.totalorder %s120, %s136
      %p138 = scmp.eq.s32.totalorder %s23, 0
      %p139 = por %p137, %p138
      %p140 = scmp.le.s32.totalorder 1, %s17
      %p141 = scmp.lt.s32.totalorder %s17, 3
      %p142 = pnand %p140, %p141
      %p143 = pneg %p142
      // Predicated region
      $region9: #{tpu_custom_call.1} parent=5 // pred_check
        _
      $region10: #{tpu_custom_call.1} parent=5 // pred_check_branch
        %145 = sbr.rel (%p142) target = $region12
      $region11: #{tpu_custom_call.1} parent=5 // pred_region
        %s146 = ssub.s32 %s17, 1
      $region12: #{tpu_custom_call.1} parent=5 // pred_fallthru
        _
      %p147 = scmp.lt.s32.totalorder %s17, 2
      // Predicated region
      $region13: #{tpu_custom_call.1} parent=5 // pred_check
        %p148 = pneg %p147
      $region14: #{tpu_custom_call.1} parent=5 // pred_check_branch
        %150 = sbr.rel (%p148) target = $region16
      $region15: #{tpu_custom_call.1} parent=5 // pred_region
        // Predicated region
        $region17: #{tpu_custom_call.1} parent=15 // pred_check
          %p151 = pneg %p64
        $region18: #{tpu_custom_call.1} parent=15 // pred_check_branch
          %153 = sbr.rel (%p151) target = $region20
        $region19: #{tpu_custom_call.1} parent=15 // pred_region
          %s154 = sand.u32 %s54, 1
          %s155 = scalar_lea.sflag [#allocation5], %s154
          %s156 = sand.u32 %s54, 1
          %s157 = smul.addr %s156, 8
          %s158 = scalar_lea.vmem [#allocation4], %s157
          %s159 = sadd.s32 %s25, %s26
          %p160 = scmp.lt.s32.totalorder %s159, 0
          %s161 = scalar_select %p160, %s159, 0
          %s163 = ssub.s32 128, 128
          %164 = vsyncadd %s155, %s163
          %s165 = smul.addr %s24, 4
          %s166 = sadd.s32 %s161, %s165
          %s167 = smul.addr %s166, 32
          %s168 = scalar_lea.hbm %s0, %s167
          %s169 = sshll.u32 %s158, 4
          %s170 = int_to_ptr.vmem [resolvable:$true] %s169
          %175 = dma.hbm_to_vmem [thread:$0]  %s168, 128, %s170, %s155, 32, 32, 2
        $region20: #{tpu_custom_call.1} parent=15 // pred_fallthru
          _
        // Predicated region
        $region21: #{tpu_custom_call.1} parent=15 // pred_check
          %p176 = pneg %p98
        $region22: #{tpu_custom_call.1} parent=15 // pred_check_branch
          %178 = sbr.rel (%p176) target = $region24
        $region23: #{tpu_custom_call.1} parent=15 // pred_region
          %s179 = sand.u32 %s88, 1
          %s180 = scalar_lea.sflag [#allocation8], %s179
          %s181 = sand.u32 %s88, 1
          %s182 = smul.addr %s181, 2
          %s183 = scalar_lea.vmem [#allocation7], %s182
          %s184 = sadd.s32 %s25, %s26
          %p185 = scmp.lt.s32.totalorder %s184, 0
          %s186 = scalar_select %p185, %s184, 0
          %s188 = ssub.s32 32, 32
          %189 = vsyncadd %s180, %s188
          %s190 = sadd.s32 %s186, %s24
          %s191 = smul.addr %s190, 32
          %s192 = scalar_lea.hbm %s1, %s191
          %s194 = sshll.u32 %s183, 4
          %s195 = int_to_ptr.vmem [resolvable:$true] %s194
          %197 = dma.hbm_to_vmem [thread:$0]  %s192, 32, %s195, %s180
        $region24: #{tpu_custom_call.1} parent=15 // pred_fallthru
          _
      $region16: #{tpu_custom_call.1} parent=5 // pred_fallthru
        _
      %p198 = scmp.le.s32.totalorder 1, %s17
      %p199 = scmp.lt.s32.totalorder %s17, 3
      %p200 = pnand %p198, %p199
      %p201 = pneg %p200
      // Predicated region
      $region25: #{tpu_custom_call.1} parent=5 // pred_check
        _
      $region26: #{tpu_custom_call.1} parent=5 // pred_check_branch
        %203 = sbr.rel (%p200) target = $region28
      $region27: #{tpu_custom_call.1} parent=5 // pred_region
        %s204 = ssub.s32 %s17, 1
        %s205 = sand.u32 %s57, 1
        %s206 = scalar_lea.sflag [#allocation5], %s205
        %s207 = sand.u32 %s57, 1
        %s208 = smul.addr %s207, 8
        %s209 = scalar_lea.vmem [#allocation4], %s208
        // Predicated region
        $region29: #{tpu_custom_call.1} parent=27 // pred_check
          %p210 = pneg %p70
        $region30: #{tpu_custom_call.1} parent=27 // pred_check_branch
          %212 = sbr.rel (%p210) target = $region32
        $region31: #{tpu_custom_call.1} parent=27 // pred_region
          %213 = dma.done %s206, 128
        $region32: #{tpu_custom_call.1} parent=27 // pred_fallthru
          _
        %s214 = sand.u32 %s91, 1
        %s215 = scalar_lea.sflag [#allocation8], %s214
        %s216 = sand.u32 %s91, 1
        %s217 = smul.addr %s216, 2
        %s218 = scalar_lea.vmem [#allocation7], %s217
        // Predicated region
        $region33: #{tpu_custom_call.1} parent=27 // pred_check
          %p219 = pneg %p104
        $region34: #{tpu_custom_call.1} parent=27 // pred_check_branch
          %221 = sbr.rel (%p219) target = $region36
        $region35: #{tpu_custom_call.1} parent=27 // pred_region
          %222 = dma.done %s215, 32
        $region36: #{tpu_custom_call.1} parent=27 // pred_fallthru
          _
        %s223 = sand.u32 %s57, 1
        %s224 = scalar_lea.sflag [#allocation5], %s223
        %s225 = sand.u32 %s57, 1
        %s226 = smul.addr %s225, 8
        %s227 = scalar_lea.vmem [#allocation4], %s226
        %p228 = pneg %p70
        %p229 = pneg %p67
        %s230 = sand.u32 %s91, 1
        %s231 = scalar_lea.sflag [#allocation8], %s230
        %s232 = sand.u32 %s91, 1
        %s233 = smul.addr %s232, 2
        %s234 = scalar_lea.vmem [#allocation7], %s233
        %p235 = pneg %p104
        %p236 = pneg %p101
        %p237 = pneg %p132
        %p238 = pneg %p129
        %s239 = sand.u32 %s119, 1
        %s240 = scalar_lea.sflag [#allocation6], %s239
        %s241 = sand.u32 %s119, 1
        %s242 = smul.addr %s241, 2
        %s243 = scalar_lea.vmem [#allocation9], %s242
        %s244 = sadd.s32 %s28, %s29
        %p245 = scmp.lt.s32.totalorder %s244, 0
        %s246 = scalar_select %p245, %s244, 0
        %s247 = sadd.s32 %s28, %s29
        %p248 = scmp.lt.s32.totalorder %s247, 0
        %s249 = scalar_select %p248, %s247, 0
        %p250 = scmp.eq.s32.totalorder %s29, 0
        // Predicated region
        $region37: #{tpu_custom_call.1} parent=27 // pred_check
          %p251 = pneg %p250
        $region38: #{tpu_custom_call.1} parent=27 // pred_check_branch
          %253 = sbr.rel (%p251) target = $region40
        $region39: #{tpu_custom_call.1} parent=27 // pred_region
          %254 = vst [vmem:[#allocation2] sm:$0x3] 0.0
          %255 = vst [vmem:[#allocation3] sm:$0x3] 0.0
        $region40: #{tpu_custom_call.1} parent=27 // pred_fallthru
          _
        %v256 = vld [vmem:[%s209] sm:$0x3]
        %v257 = vld [vmem:[%s209 + $0x2] sm:$0x3]
        %v258 = vld [vmem:[%s209 + $0x4] sm:$0x3]
        %v259 = vld [vmem:[%s209 + $0x6] sm:$0x3]
        %v260 = vld [vmem:[%s218] sm:$0x3]
        %vm261 = vcmask 1041408
        %v262 = vsel %vm261, %v256, -inf
        %v263 = vsel %vm261, %v257, -inf
        %v264 = vsel %vm261, %v258, -inf
        %v265 = vsel %vm261, %v259, -inf
        %v266 = vmax.f32 %v262, %v263
        %v267 = vmax.f32 %v264, %v265
        %v268 = vmax.f32 %v266, %v267
        %v269 = vsub.f32 %v256, %v268
        %v270 = vsub.f32 %v257, %v268
        %v271 = vsub.f32 %v258, %v268
        %v272 = vsub.f32 %v259, %v268
        %v273 = vmul.f32 %v269, 1.442695
        %v274 = vpow.pop %v273
        %v275 = vmul.f32 %v270, 1.442695
        %v276 = vpow.pop %v275
        %v277 = vmul.f32 %v271, 1.442695
        %v278 = vpow.pop %v277
        %v279 = vmul.f32 %v272, 1.442695
        %v280 = vpow.pop %v279
        %v281 = vsel %vm261, %v274, 0.0
        %v282 = vsel %vm261, %v276, 0.0
        %v283 = vadd.f32 %v281, %v282
        %v284 = vsel %vm261, %v278, 0.0
        %v285 = vadd.f32 %v283, %v284
        %v286 = vsel %vm261, %v280, 0.0
        %v287 = vadd.f32 %v285, %v286
        %v288 = vlog2.pop %v287
        %v289 = vmul.f32 %v288, 0.6931472
        %v290 = vadd.f32 %v268, %v289
        %vm291 = vcmp.eq.s32.totalorder %v260, 0
        %vm292 = vcmp.eq.s32.totalorder %v260, 1
        %vm293 = vcmp.eq.s32.totalorder %v260, 2
        %vm294 = vcmp.eq.s32.totalorder %v260, 3
        %v295 = vsel %vm291, %v256, 0.0
        %v296 = vsel %vm292, %v257, 0.0
        %v297 = vsel %vm293, %v258, 0.0
        %v298 = vsel %vm294, %v259, 0.0
        %v299 = vsel %vm261, %v295, 0.0
        %v300 = vsel %vm261, %v296, 0.0
        %v301 = vadd.f32 %v299, %v300
        %v302 = vsel %vm261, %v297, 0.0
        %v303 = vadd.f32 %v301, %v302
        %v304 = vsel %vm261, %v298, 0.0
        %v305 = vadd.f32 %v303, %v304
        %v306 = vsub.f32 %v305, %v290
        %v307 = vmax.f32 %v306, -36.841362
        %v308 = vmul.f32 %v307, 1.442695
        %v309 = vpow.pop %v308
        %v310 = vsub.f32 1.0, %v309
        %v311 = vmul.f32 %v310, %v310
        %v312 = vmul.f32 %v311, -0.25
        %v313 = vmul.f32 %v312, %v307
        %vm314 = vcmp.ne.s32.totalorder %v260, 4294967196
        %v315 = vld [vmem:[#allocation2] sm:$0x3]
        %v316 = vsel %vm314, %v313, 0.0
        %v317 = vadd.f32 %v315, %v316
        %318 = vst [vmem:[#allocation2] sm:$0x3] %v317
        %v319 = vld [vmem:[#allocation3] sm:$0x3]
        %v320 = vsel %vm314, 1, 0
        %v321 = vcvt.s32.f32 %v320
        %v322 = vadd.f32 %v319, %v321
        %323 = vst [vmem:[#allocation3] sm:$0x3] %v322
        // Predicated region
        $region41: #{tpu_custom_call.1} parent=27 // pred_check
          %p324 = pneg %p250
        $region42: #{tpu_custom_call.1} parent=27 // pred_check_branch
          %326 = sbr.rel (%p324) target = $region44
        $region43: #{tpu_custom_call.1} parent=27 // pred_region
          %v327 = vld [vmem:[#allocation2] sm:$0x3]
          %v328 = vsel %vm261, %v327, 0.0
          %v329 = vrot.slane %v328, 4
          %v330 = vadd.f32 %v328, %v329
          %v331 = vrot.slane %v330, 2
          %v332 = vadd.f32 %v330, %v331
          %v333 = vrot.slane %v332, 1
          %v334 = vadd.f32 %v332, %v333
          %v335 = vld [vmem:[#allocation3] sm:$0x3]
          %v336 = vsel %vm261, %v335, 0.0
          %v337 = vrot.slane %v336, 4
          %v338 = vadd.f32 %v336, %v337
          %v339 = vrot.slane %v338, 2
          %v340 = vadd.f32 %v338, %v339
          %v341 = vrot.slane %v340, 1
          %v342 = vadd.f32 %v340, %v341
          %vm343 = vcmask 1040384
          %v344 = vsel %vm343, %v334, %v342
          %345 = vst [vmem:[%s243] sm:$0x3] %v344
        $region44: #{tpu_custom_call.1} parent=27 // pred_fallthru
          _
        %s346 = sand.u32 %s119, 1
        %s347 = scalar_lea.sflag [#allocation6], %s346
        %s348 = sand.u32 %s119, 1
        %s349 = smul.addr %s348, 2
        %s350 = scalar_lea.vmem [#allocation9], %s349
        // Predicated region
        $region45: #{tpu_custom_call.1} parent=27 // pred_check
          %p351 = pneg %p129
        $region46: #{tpu_custom_call.1} parent=27 // pred_check_branch
          %353 = sbr.rel (%p351) target = $region48
        $region47: #{tpu_custom_call.1} parent=27 // pred_region
          %s355 = ssub.s32 32, 32
          %356 = vsyncadd %s347, %s355
          %s357 = sadd.s32 %s28, %s27
          %s358 = smul.addr %s357, 32
          %s359 = scalar_lea.hbm %s2, %s358
          %s361 = sshll.u32 %s350, 4
          %s362 = int_to_ptr.vmem [resolvable:$true] %s361
          %364 = dma.vmem_to_hbm [thread:$0]  %s362, 32, %s359, %s347
        $region48: #{tpu_custom_call.1} parent=27 // pred_fallthru
          _
      $region28: #{tpu_custom_call.1} parent=5 // pred_fallthru
        _
      %p365 = scmp.le.s32.totalorder 2, %s17
      // Predicated region
      $region49: #{tpu_custom_call.1} parent=5 // pred_check
        %p366 = pneg %p365
      $region50: #{tpu_custom_call.1} parent=5 // pred_check_branch
        %368 = sbr.rel (%p366) target = $region52
      $region51: #{tpu_custom_call.1} parent=5 // pred_region
        %s369 = ssub.s32 %s17, 2
        // Predicated region
        $region53: #{tpu_custom_call.1} parent=51 // pred_check
          %p370 = pneg %p135
        $region54: #{tpu_custom_call.1} parent=51 // pred_check_branch
          %372 = sbr.rel (%p370) target = $region56
        $region55: #{tpu_custom_call.1} parent=51 // pred_region
          %s373 = sand.u32 %s120, 1
          %s374 = scalar_lea.sflag [#allocation6], %s373
          %s375 = sand.u32 %s120, 1
          %s376 = smul.addr %s375, 2
          %s377 = scalar_lea.vmem [#allocation9], %s376
          %378 = dma.done %s374, 32
        $region56: #{tpu_custom_call.1} parent=51 // pred_fallthru
          _
      $region52: #{tpu_custom_call.1} parent=5 // pred_fallthru
        _
    $region6: #{tpu_custom_call.1} parent=1 // loop_footer
      %s21 = sadd.s32 1, %s17
    $region7: #{tpu_custom_call.1} parent=1 // loop_footer_branch
      %16 = sbr.rel target = $region3
    $region8: #{tpu_custom_call.1} parent=1 // loop_exit
      _
    %379 = vsyncpa [#allocation5], 1
    %s380 = scalar_lea.sflag [#allocation5], 1
    %381 = vsyncpa %s380, 1
    %382 = vsyncpa [#allocation8], 1
    %s383 = scalar_lea.sflag [#allocation8], 1
    %384 = vsyncpa %s383, 1
    %385 = vsyncpa [#allocation6], 1
    %s386 = scalar_lea.sflag [#allocation6], 1
    %387 = vsyncpa %s386, 1

</llo_original>
